<compile_context>
chip_gen: v7x
topology: tpu7x:2x2x1
jax: 0.10.0
libtpu: 0.0.40
codegen_flags: <defaults>
</compile_context>

<pallas_src>
import jax
import jax.numpy as jnp
from jax.experimental import pallas as pl
from jax.experimental.pallas import tpu as pltpu


def _round_up(x, m):
    return ((x + m - 1) // m) * m


def _critic_kernel(xproj_ref, whh_ref, b_ref, wfc_ref, bfc_ref, out_ref):
    # xproj_ref : (N, TB, H)  time-major, pre-gathered input projection rows
    # whh_ref   : (H, H)      W_hh^T
    # b_ref     : (1, H)      b_ih + b_hh
    # wfc_ref   : (1, H)      W_fc (row)
    # bfc_ref   : (1, 1)      b_fc
    # out_ref   : (TB, 1)
    n_steps = xproj_ref.shape[0]

    # Hoist weight / bias loads out of the unrolled recurrence (no re-loads,
    # no repeated broadcasts inside the chain).
    w_hh = whh_ref[...]
    bias = b_ref[...]
    w_fc = wfc_ref[...]

    # h_0 = 0, so the first step has no W_hh contribution.
    h = jnp.tanh(xproj_ref[0] + bias)

    # n_steps is a static Python int -> fully unrolled recurrence with static
    # slices; the only sequential work per step is one small matmul + tanh.
    for t in range(1, n_steps):
        h = jnp.tanh(xproj_ref[t]
                     + jnp.dot(h, w_hh, preferred_element_type=jnp.float32)
                     + bias)

    # Head: VPU multiply + lane (XLU) reduction instead of a 1-wide MXU matmul.
    out_ref[...] = jnp.sum(h * w_fc, axis=-1, keepdims=True) + bfc_ref[...]


def init_params(key, input_size, hidden_size):
    """Deterministic init matching PyTorch shapes: uniform(-1/sqrt(H), 1/sqrt(H))."""
    k1, k2, k3, k4, k5, k6 = jax.random.split(key, 6)
    bound = float(hidden_size) ** -0.5
    w_ih = jax.random.uniform(k1, (hidden_size, input_size), jnp.float32, -bound, bound)
    w_hh = jax.random.uniform(k2, (hidden_size, hidden_size), jnp.float32, -bound, bound)
    b_ih = jax.random.uniform(k3, (hidden_size,), jnp.float32, -bound, bound)
    b_hh = jax.random.uniform(k4, (hidden_size,), jnp.float32, -bound, bound)
    w_fc = jax.random.uniform(k5, (1, hidden_size), jnp.float32, -bound, bound)
    b_fc = jax.random.uniform(k6, (1,), jnp.float32, -bound, bound)
    # Pre-transpose / combine for the kernel:
    #   (I,H) W_ih^T, (H,H) W_hh^T, (1,H) b_ih+b_hh, (1,H) W_fc row, (1,1) b_fc
    return (w_ih.T, w_hh.T, (b_ih + b_hh)[None, :], w_fc, b_fc[None, :])


def critic_forward(x, params, max_possible_load):
    """x: (B, n) int array of bin loads. Returns (B,) float32."""
    wih_t, whh_t, b, wfc_row, bfc = params
    batch, n_steps = x.shape
    hidden = whh_t.shape[0]

    # Glue (clamp, sort) in plain JAX.
    x_sorted = jnp.sort(jnp.minimum(x, max_possible_load), axis=-1)   # (B, N)

    # one_hot(x_sorted) @ W_ih^T == row-gather of W_ih^T: no one-hot tensor,
    # no input matmul inside the serial recurrence.
    x_proj = jnp.take(wih_t, x_sorted, axis=0)        # (B, N, H)
    x_proj = jnp.transpose(x_proj, (1, 0, 2))         # (N, B, H) time-major

    # Sublane-aligned batch tiles (<=128 rows per tile); batch axis on the grid.
    tb = min(128, _round_up(batch, 8))
    padded = _round_up(batch, tb)
    if padded != batch:
        x_proj = jnp.pad(x_proj, ((0, 0), (0, padded - batch), (0, 0)))
    num_tiles = padded // tb

    cost = pl.CostEstimate(
        flops=2 * n_steps * padded * hidden * hidden + 2 * padded * hidden,
        transcendentals=n_steps * padded * hidden,
        bytes_accessed=4 * (x_proj.size + whh_t.size + b.size
                            + wfc_row.size + bfc.size + padded),
    )

    out = pl.pallas_call(
        _critic_kernel,
        out_shape=jax.ShapeDtypeStruct((padded, 1), jnp.float32),
        grid=(num_tiles,),
        in_specs=[
            pl.BlockSpec((n_steps, tb, hidden), lambda i: (0, i, 0)),
            pl.BlockSpec(whh_t.shape, lambda i: (0, 0)),
            pl.BlockSpec(b.shape, lambda i: (0, 0)),
            pl.BlockSpec(wfc_row.shape, lambda i: (0, 0)),
            pl.BlockSpec(bfc.shape, lambda i: (0, 0)),
        ],
        out_specs=pl.BlockSpec((tb, 1), lambda i: (i, 0)),
        compiler_params=pltpu.CompilerParams(
            dimension_semantics=("parallel",)),
        cost_estimate=cost,
    )(x_proj, whh_t, b, wfc_row, bfc)
    return out[:batch, 0]


def critic_forward_ref(x, params, max_possible_load):
    """Pure-JAX reference (one-hot form) of the same forward pass."""
    num_classes = max_possible_load + 1
    wih_t, whh_t, b, wfc_row, bfc = params
    x_sorted = jnp.sort(jnp.minimum(x, max_possible_load), axis=-1)
    onehot = jax.nn.one_hot(x_sorted, num_classes, dtype=jnp.float32)   # (B, N, I)
    batch, n_steps, _ = onehot.shape
    h = jnp.zeros((batch, whh_t.shape[0]), jnp.float32)
    for t in range(n_steps):
        h = jnp.tanh(onehot[:, t, :] @ wih_t + h @ whh_t + b)
    return (h @ wfc_row.T + bfc)[:, 0]


if __name__ == "__main__":
    # Small, module-consistent shapes.
    n = 8                   # number of bins == RNN sequence length
    max_possible_load = 7   # -> one-hot width I = 8
    hidden_size = 32
    batch = 2

    key = jax.random.PRNGKey(0)
    k_params, k_x = jax.random.split(key)
    params = init_params(k_params, max_possible_load + 1, hidden_size)

    # Integer load vectors; values above max_possible_load exercise the clamp.
    x = jax.random.randint(k_x, (batch, n), 0, max_possible_load + 3, dtype=jnp.int32)

    out = critic_forward(x, params, max_possible_load)
    out = jax.block_until_ready(out)

    ref = critic_forward_ref(x, params, max_possible_load)
    assert out.shape == (batch,)
    assert jnp.allclose(out, ref, rtol=1e-4, atol=1e-4), (out, ref)

    print("KERNEL_OK")
</pallas_src>

<mosaic_0001>
module attributes {stable_mosaic.version = 11 : i64} {
  func.func @_critic_kernel(%arg0: i32, %arg1: memref<8x8x32xf32, #tpu.memory_space<vmem>>, %arg2: memref<32x32xf32, #tpu.memory_space<vmem>>, %arg3: memref<1x32xf32, #tpu.memory_space<vmem>>, %arg4: memref<1x32xf32, #tpu.memory_space<vmem>>, %arg5: memref<1x1xf32, #tpu.memory_space<vmem>>, %arg6: memref<8x1xf32, #tpu.memory_space<vmem>>) attributes {dimension_semantics = [#tpu.dimension_semantics<parallel>], iteration_bounds = array<i64: 1>, scalar_prefetch = 0 : i64, scratch_operands = 0 : i64, tpu.core_type = #tpu.core_type<tc>, window_params = [{transform_indices = @transform_0, window_bounds = array<i64: 8, 8, 32>}, {pipeline_mode = #tpu.pipeline_mode<synchronous>, transform_indices = @transform_1, window_bounds = array<i64: 32, 32>}, {pipeline_mode = #tpu.pipeline_mode<synchronous>, transform_indices = @transform_2, window_bounds = array<i64: 1, 32>}, {pipeline_mode = #tpu.pipeline_mode<synchronous>, transform_indices = @transform_3, window_bounds = array<i64: 1, 32>}, {pipeline_mode = #tpu.pipeline_mode<synchronous>, transform_indices = @transform_4, window_bounds = array<i64: 1, 1>}, {transform_indices = @transform_5, window_bounds = array<i64: 8, 1>}]} {
    %c0 = arith.constant 0 : index
    %c0_0 = arith.constant 0 : index
    %0 = vector.load %arg2[%c0, %c0_0] : memref<32x32xf32, #tpu.memory_space<vmem>>, vector<32x32xf32>
    %c0_1 = arith.constant 0 : index
    %c0_2 = arith.constant 0 : index
    %1 = vector.load %arg3[%c0_1, %c0_2] : memref<1x32xf32, #tpu.memory_space<vmem>>, vector<1x32xf32>
    %c0_3 = arith.constant 0 : index
    %c0_4 = arith.constant 0 : index
    %2 = vector.load %arg4[%c0_3, %c0_4] : memref<1x32xf32, #tpu.memory_space<vmem>>, vector<1x32xf32>
    %c0_5 = arith.constant 0 : index
    %c0_6 = arith.constant 0 : index
    %c0_7 = arith.constant 0 : index
    %3 = vector.load %arg1[%c0_5, %c0_6, %c0_7] : memref<8x8x32xf32, #tpu.memory_space<vmem>>, vector<1x8x32xf32>
    %4 = vector.shape_cast %3 : vector<1x8x32xf32> to vector<8x32xf32>
    %5 = vector.broadcast %1 : vector<1x32xf32> to vector<8x32xf32>
    %6 = arith.addf %4, %5 : vector<8x32xf32>
    %7 = math.tanh %6 : vector<8x32xf32>
    %c1 = arith.constant 1 : index
    %c0_8 = arith.constant 0 : index
    %c0_9 = arith.constant 0 : index
    %8 = vector.load %arg1[%c1, %c0_8, %c0_9] : memref<8x8x32xf32, #tpu.memory_space<vmem>>, vector<1x8x32xf32>
    %9 = vector.shape_cast %8 : vector<1x8x32xf32> to vector<8x32xf32>
    %cst = arith.constant dense<0.000000e+00> : vector<8x32xf32>
    %10 = tpu.matmul %7, %0, %cst {dimension_numbers = #tpu.dot_dimension_numbers<[1], [0], [0], [1], [0, 0, 1, 1], [], []>} : vector<8x32xf32>, vector<32x32xf32>, vector<8x32xf32> -> vector<8x32xf32>
    %11 = arith.addf %9, %10 : vector<8x32xf32>
    %12 = vector.broadcast %1 : vector<1x32xf32> to vector<8x32xf32>
    %13 = arith.addf %11, %12 : vector<8x32xf32>
    %14 = math.tanh %13 : vector<8x32xf32>
    %c2 = arith.constant 2 : index
    %c0_10 = arith.constant 0 : index
    %c0_11 = arith.constant 0 : index
    %15 = vector.load %arg1[%c2, %c0_10, %c0_11] : memref<8x8x32xf32, #tpu.memory_space<vmem>>, vector<1x8x32xf32>
    %16 = vector.shape_cast %15 : vector<1x8x32xf32> to vector<8x32xf32>
    %cst_12 = arith.constant dense<0.000000e+00> : vector<8x32xf32>
    %17 = tpu.matmul %14, %0, %cst_12 {dimension_numbers = #tpu.dot_dimension_numbers<[1], [0], [0], [1], [0, 0, 1, 1], [], []>} : vector<8x32xf32>, vector<32x32xf32>, vector<8x32xf32> -> vector<8x32xf32>
    %18 = arith.addf %16, %17 : vector<8x32xf32>
    %19 = vector.broadcast %1 : vector<1x32xf32> to vector<8x32xf32>
    %20 = arith.addf %18, %19 : vector<8x32xf32>
    %21 = math.tanh %20 : vector<8x32xf32>
    %c3 = arith.constant 3 : index
    %c0_13 = arith.constant 0 : index
    %c0_14 = arith.constant 0 : index
    %22 = vector.load %arg1[%c3, %c0_13, %c0_14] : memref<8x8x32xf32, #tpu.memory_space<vmem>>, vector<1x8x32xf32>
    %23 = vector.shape_cast %22 : vector<1x8x32xf32> to vector<8x32xf32>
    %cst_15 = arith.constant dense<0.000000e+00> : vector<8x32xf32>
    %24 = tpu.matmul %21, %0, %cst_15 {dimension_numbers = #tpu.dot_dimension_numbers<[1], [0], [0], [1], [0, 0, 1, 1], [], []>} : vector<8x32xf32>, vector<32x32xf32>, vector<8x32xf32> -> vector<8x32xf32>
    %25 = arith.addf %23, %24 : vector<8x32xf32>
    %26 = vector.broadcast %1 : vector<1x32xf32> to vector<8x32xf32>
    %27 = arith.addf %25, %26 : vector<8x32xf32>
    %28 = math.tanh %27 : vector<8x32xf32>
    %c4 = arith.constant 4 : index
    %c0_16 = arith.constant 0 : index
    %c0_17 = arith.constant 0 : index
    %29 = vector.load %arg1[%c4, %c0_16, %c0_17] : memref<8x8x32xf32, #tpu.memory_space<vmem>>, vector<1x8x32xf32>
    %30 = vector.shape_cast %29 : vector<1x8x32xf32> to vector<8x32xf32>
    %cst_18 = arith.constant dense<0.000000e+00> : vector<8x32xf32>
    %31 = tpu.matmul %28, %0, %cst_18 {dimension_numbers = #tpu.dot_dimension_numbers<[1], [0], [0], [1], [0, 0, 1, 1], [], []>} : vector<8x32xf32>, vector<32x32xf32>, vector<8x32xf32> -> vector<8x32xf32>
    %32 = arith.addf %30, %31 : vector<8x32xf32>
    %33 = vector.broadcast %1 : vector<1x32xf32> to vector<8x32xf32>
    %34 = arith.addf %32, %33 : vector<8x32xf32>
    %35 = math.tanh %34 : vector<8x32xf32>
    %c5 = arith.constant 5 : index
    %c0_19 = arith.constant 0 : index
    %c0_20 = arith.constant 0 : index
    %36 = vector.load %arg1[%c5, %c0_19, %c0_20] : memref<8x8x32xf32, #tpu.memory_space<vmem>>, vector<1x8x32xf32>
    %37 = vector.shape_cast %36 : vector<1x8x32xf32> to vector<8x32xf32>
    %cst_21 = arith.constant dense<0.000000e+00> : vector<8x32xf32>
    %38 = tpu.matmul %35, %0, %cst_21 {dimension_numbers = #tpu.dot_dimension_numbers<[1], [0], [0], [1], [0, 0, 1, 1], [], []>} : vector<8x32xf32>, vector<32x32xf32>, vector<8x32xf32> -> vector<8x32xf32>
    %39 = arith.addf %37, %38 : vector<8x32xf32>
    %40 = vector.broadcast %1 : vector<1x32xf32> to vector<8x32xf32>
    %41 = arith.addf %39, %40 : vector<8x32xf32>
    %42 = math.tanh %41 : vector<8x32xf32>
    %c6 = arith.constant 6 : index
    %c0_22 = arith.constant 0 : index
    %c0_23 = arith.constant 0 : index
    %43 = vector.load %arg1[%c6, %c0_22, %c0_23] : memref<8x8x32xf32, #tpu.memory_space<vmem>>, vector<1x8x32xf32>
    %44 = vector.shape_cast %43 : vector<1x8x32xf32> to vector<8x32xf32>
    %cst_24 = arith.constant dense<0.000000e+00> : vector<8x32xf32>
    %45 = tpu.matmul %42, %0, %cst_24 {dimension_numbers = #tpu.dot_dimension_numbers<[1], [0], [0], [1], [0, 0, 1, 1], [], []>} : vector<8x32xf32>, vector<32x32xf32>, vector<8x32xf32> -> vector<8x32xf32>
    %46 = arith.addf %44, %45 : vector<8x32xf32>
    %47 = vector.broadcast %1 : vector<1x32xf32> to vector<8x32xf32>
    %48 = arith.addf %46, %47 : vector<8x32xf32>
    %49 = math.tanh %48 : vector<8x32xf32>
    %c7 = arith.constant 7 : index
    %c0_25 = arith.constant 0 : index
    %c0_26 = arith.constant 0 : index
    %50 = vector.load %arg1[%c7, %c0_25, %c0_26] : memref<8x8x32xf32, #tpu.memory_space<vmem>>, vector<1x8x32xf32>
    %51 = vector.shape_cast %50 : vector<1x8x32xf32> to vector<8x32xf32>
    %cst_27 = arith.constant dense<0.000000e+00> : vector<8x32xf32>
    %52 = tpu.matmul %49, %0, %cst_27 {dimension_numbers = #tpu.dot_dimension_numbers<[1], [0], [0], [1], [0, 0, 1, 1], [], []>} : vector<8x32xf32>, vector<32x32xf32>, vector<8x32xf32> -> vector<8x32xf32>
    %53 = arith.addf %51, %52 : vector<8x32xf32>
    %54 = vector.broadcast %1 : vector<1x32xf32> to vector<8x32xf32>
    %55 = arith.addf %53, %54 : vector<8x32xf32>
    %56 = math.tanh %55 : vector<8x32xf32>
    %57 = vector.broadcast %2 : vector<1x32xf32> to vector<8x32xf32>
    %58 = arith.mulf %56, %57 : vector<8x32xf32>
    %cst_28 = arith.constant dense<0.000000e+00> : vector<8xf32>
    %59 = vector.multi_reduction <add>, %58, %cst_28 [1] : vector<8x32xf32> to vector<8xf32>
    %60 = vector.shape_cast %59 : vector<8xf32> to vector<8x1xf32>
    %c0_29 = arith.constant 0 : index
    %c0_30 = arith.constant 0 : index
    %61 = vector.load %arg5[%c0_29, %c0_30] : memref<1x1xf32, #tpu.memory_space<vmem>>, vector<1x1xf32>
    %62 = vector.broadcast %61 : vector<1x1xf32> to vector<8x1xf32>
    %63 = arith.addf %60, %62 : vector<8x1xf32>
    %c0_31 = arith.constant 0 : index
    %c0_32 = arith.constant 0 : index
    %64 = vector.load %arg6[%c0_31, %c0_32] : memref<8x1xf32, #tpu.memory_space<vmem>>, vector<8x1xf32>
    tpu.vector_store %arg6[%c0_31, %c0_32], %63 {strides = array<i32>} : memref<8x1xf32, #tpu.memory_space<vmem>>, vector<8x1xf32>,
    return
  }
  func.func @transform_0(%arg0: i32) -> (i32, i32, i32) {
    %c0_i32 = arith.constant 0 : i32
    %c0_i32_0 = arith.constant 0 : i32
    %c0_i32_1 = arith.constant 0 : i32
    return %c0_i32, %arg0, %c0_i32_0 : i32, i32, i32
  }
  func.func @transform_1(%arg0: i32) -> (i32, i32) {
    %c0_i32 = arith.constant 0 : i32
    %c0_i32_0 = arith.constant 0 : i32
    %c0_i32_1 = arith.constant 0 : i32
    return %c0_i32, %c0_i32_0 : i32, i32
  }
  func.func @transform_2(%arg0: i32) -> (i32, i32) {
    %c0_i32 = arith.constant 0 : i32
    %c0_i32_0 = arith.constant 0 : i32
    %c0_i32_1 = arith.constant 0 : i32
    return %c0_i32, %c0_i32_0 : i32, i32
  }
  func.func @transform_3(%arg0: i32) -> (i32, i32) {
    %c0_i32 = arith.constant 0 : i32
    %c0_i32_0 = arith.constant 0 : i32
    %c0_i32_1 = arith.constant 0 : i32
    return %c0_i32, %c0_i32_0 : i32, i32
  }
  func.func @transform_4(%arg0: i32) -> (i32, i32) {
    %c0_i32 = arith.constant 0 : i32
    %c0_i32_0 = arith.constant 0 : i32
    %c0_i32_1 = arith.constant 0 : i32
    return %c0_i32, %c0_i32_0 : i32, i32
  }
  func.func @transform_5(%arg0: i32) -> (i32, i32) {
    %c0_i32 = arith.constant 0 : i32
    %c0_i32_0 = arith.constant 0 : i32
    return %arg0, %c0_i32 : i32, i32
  }
}

</mosaic_0001>

<llo_original>
// kernel: tpu_custom_call.1
$region0: #{tpu_custom_call.1}
  #allocation0 [shape = 'u32[]', space=smem, size = 0x4, offset = 0x4, fixed_abs, tag = 'smem constant byte address 0x4 - core index']
  #allocation1 [shape = 'u32[144,128]{1,0:T(1,128)}', space=vmem, size = 0x12000, scoped, tag = 'internal scratch']
  #allocation2 [shape = 'f32[1,1]{1,0:T(1,128)S(1)}', space=vmem, size = 0x200, scoped, tag = 'scoped memory for tpu_custom_call.1']
  %s0 = inlined_call_operand.hbm [shape: f32[8,8,32], index: 0, kind: input, shape index: {}]
  %s1 = inlined_call_operand.hbm [shape: f32[32,32], index: 1, kind: input, shape index: {}]
  %s2 = inlined_call_operand.vmem [shape: f32[1,32], index: 2, kind: input, shape index: {}]
  %s3 = inlined_call_operand.vmem [shape: f32[1,32], index: 3, kind: input, shape index: {}]
  %s4 = inlined_call_operand.<no memory space> [shape: f32[1,1], index: 4, kind: input, shape index: {}]
  %s5 = inlined_call_operand.vmem [shape: f32[8,1], index: 5, kind: output, shape index: {}]
  %s6 = sld [smem:[#allocation0]]
  $region38: #{tpu_custom_call.1} parent=0
    _
  %s8 = ssub.s32 1, %s6
  %s9 = scalar_select 0, %s8, %s6
  %v10 = vstv %s4
  %11 = vst [vmem:[#allocation2] sm:$0x1] %v10
  $region1: #{tpu_custom_call.1} parent=0
    #allocation3 [shape = 'u8[32768]{0}', space=vmem, size = 0x8000, scoped, tag = 'input window, operand 0, single buffered']
    #allocation4 [shape = 's32[1]{0}', space=sflag, size = 0x4, scoped, tag = 'scoped memory for tpu_custom_call.1']
    #allocation5 [shape = 'u8[16384]{0}', space=vmem, size = 0x4000, scoped, tag = 'input window, operand 1, single buffered']
    #allocation6 [shape = 's32[1]{0}', space=sflag, size = 0x4, scoped, tag = 'scoped memory for tpu_custom_call.1']
    %12 = vsyncpa [#allocation4], 0
    %13 = vsyncpa [#allocation6], 0
    // Predicated region
    $region2: #{tpu_custom_call.1} parent=1 // pred_check
      _
    $region3: #{tpu_custom_call.1} parent=1 // pred_check_branch
      %15 = sbr.rel (0) target = $region5
    $region4: #{tpu_custom_call.1} parent=1 // pred_region
      %s17 = ssub.s32 1024, 1024
      %18 = vsyncadd [#allocation4], %s17
      %s19 = sshll.u32 [#allocation3], 4
      %s20 = int_to_ptr.vmem [resolvable:$true] %s19
      %25 = dma.hbm_to_vmem [thread:$0]  %s0, 1024, %s20, [#allocation4], 128, 128, 8
    $region5: #{tpu_custom_call.1} parent=1 // pred_fallthru
      _
    // Predicated region
    $region6: #{tpu_custom_call.1} parent=1 // pred_check
      _
    $region7: #{tpu_custom_call.1} parent=1 // pred_check_branch
      %27 = sbr.rel (0) target = $region9
    $region8: #{tpu_custom_call.1} parent=1 // pred_region
      %s29 = ssub.s32 512, 512
      %30 = vsyncadd [#allocation6], %s29
      %s31 = sshll.u32 [#allocation5], 4
      %s32 = int_to_ptr.vmem [resolvable:$true] %s31
      %37 = dma.hbm_to_vmem [thread:$0]  %s1, 512, %s32, [#allocation6], 128, 128, 8
    $region9: #{tpu_custom_call.1} parent=1 // pred_fallthru
      _
    // Predicated region
    $region10: #{tpu_custom_call.1} parent=1 // pred_check
      _
    $region11: #{tpu_custom_call.1} parent=1 // pred_check_branch
      %39 = sbr.rel (0) target = $region13
    $region12: #{tpu_custom_call.1} parent=1 // pred_region
      _
    $region13: #{tpu_custom_call.1} parent=1 // pred_fallthru
      _
    // Predicated region
    $region14: #{tpu_custom_call.1} parent=1 // pred_check
      _
    $region15: #{tpu_custom_call.1} parent=1 // pred_check_branch
      %41 = sbr.rel (0) target = $region17
    $region16: #{tpu_custom_call.1} parent=1 // pred_region
      _
    $region17: #{tpu_custom_call.1} parent=1 // pred_fallthru
      _
    // Predicated region
    $region18: #{tpu_custom_call.1} parent=1 // pred_check
      _
    $region19: #{tpu_custom_call.1} parent=1 // pred_check_branch
      %43 = sbr.rel (0) target = $region21
    $region20: #{tpu_custom_call.1} parent=1 // pred_region
      _
    $region21: #{tpu_custom_call.1} parent=1 // pred_fallthru
      _
    // Predicated region
    $region22: #{tpu_custom_call.1} parent=1 // pred_check
      _
    $region23: #{tpu_custom_call.1} parent=1 // pred_check_branch
      %45 = sbr.rel (0) target = $region25
    $region24: #{tpu_custom_call.1} parent=1 // pred_region
      %46 = dma.done [#allocation4], 1024
    $region25: #{tpu_custom_call.1} parent=1 // pred_fallthru
      _
    // Predicated region
    $region26: #{tpu_custom_call.1} parent=1 // pred_check
      _
    $region27: #{tpu_custom_call.1} parent=1 // pred_check_branch
      %48 = sbr.rel (0) target = $region29
    $region28: #{tpu_custom_call.1} parent=1 // pred_region
      %49 = dma.done [#allocation6], 512
    $region29: #{tpu_custom_call.1} parent=1 // pred_fallthru
      _
    %v50 = vld [vmem:[#allocation5] sm:$0xff]
    %v51 = vld [vmem:[#allocation5 + $0x8] sm:$0xff]
    %v52 = vld [vmem:[#allocation5 + $0x10] sm:$0xff]
    %v53 = vld [vmem:[#allocation5 + $0x18] sm:$0xff]
    %v54 = vld [vmem:[%s2] sm:$0x1]
    %v55 = vld [vmem:[%s3] sm:$0x1]
    %v56 = vld [vmem:[#allocation3] sm:$0xff]
    %v58 = vlaneseq
    %v59 = vshrl.u32 %v58, 7
    %v60 = vsub.s32 0, %v59
    %v61 = vrot.slane %v54, %v60
    %v63 = vadd.f32 %v56, %v61
    %v64 = vtanh.pop %v63
    %s65 = scalar_lea.vmem [#allocation3], 8
    %v66 = vld [vmem:[%s65] sm:$0xff]
    %vm67 = vcmask 261120
    %v69 = vsel %vm67, %v64, 0
    %71 = vmatprep.subr.mxu0 0.0
    %72 = vmatpush1.msra.mxu0 %v50
    %73 = vmatprep.subr.mxu0 0.0
    %74 = vmatpush1.msra.mxu0 %v51
    %75 = vmatprep.subr.mxu0 0.0
    %76 = vmatpush1.msra.mxu0 %v52
    %77 = vmatprep.subr.mxu0 0.0
    %78 = vmatpush1.msra.mxu0 %v53
    %79 = vmatprep.subr.mxu0 0.0
    %80 = vmatpush1.msra.mxu0 0.0
    %81 = vmatprep.subr.mxu0 0.0
    %82 = vmatpush1.msra.mxu0 0.0
    %83 = vmatprep.subr.mxu0 0.0
    %84 = vmatpush1.msra.mxu0 0.0
    %85 = vmatprep.subr.mxu0 0.0
    %86 = vmatpush1.msra.mxu0 0.0
    %87 = vmatprep.subr.mxu0 0.0
    %88 = vmatpush1.msra.mxu0 0.0
    %89 = vmatprep.subr.mxu0 0.0
    %90 = vmatpush1.msra.mxu0 0.0
    %91 = vmatprep.subr.mxu0 0.0
    %92 = vmatpush1.msra.mxu0 0.0
    %93 = vmatprep.subr.mxu0 0.0
    %94 = vmatpush1.msra.mxu0 0.0
    %95 = vmatprep.subr.mxu0 0.0
    %96 = vmatpush1.msra.mxu0 0.0
    %97 = vmatprep.subr.mxu0 0.0
    %98 = vmatpush1.msra.mxu0 0.0
    %99 = vmatprep.subr.mxu0 0.0
    %100 = vmatpush1.msra.mxu0 0.0
    %101 = vmatprep.subr.mxu0 0.0
    %102 = vmatpush1.msra.mxu0 0.0
    %103 = vmatprep.subr.mxu0 0.0
    %104 = vmatpush1.msra.mxu0 0.0
    %105 = vmatprep.subr.mxu0 0.0
    %106 = vmatpush1.msra.mxu0 0.0
    %107 = vmatprep.subr.mxu0 0.0
    %108 = vmatpush1.msra.mxu0 0.0
    %109 = vmatprep.subr.mxu0 0.0
    %110 = vmatpush1.msra.mxu0 0.0
    %111 = vmatprep.subr.mxu0 0.0
    %112 = vmatpush1.msra.mxu0 0.0
    %113 = vmatprep.subr.mxu0 0.0
    %114 = vmatpush1.msra.mxu0 0.0
    %115 = vmatprep.subr.mxu0 0.0
    %116 = vmatpush1.msra.mxu0 0.0
    %117 = vmatprep.subr.mxu0 0.0
    %118 = vmatpush1.msra.mxu0 0.0
    %119 = vmatprep.subr.mxu0 0.0
    %120 = vmatpush1.msra.mxu0 0.0
    %121 = vmatprep.subr.mxu0 0.0
    %122 = vmatpush1.msra.mxu0 0.0
    %123 = vmatprep.subr.mxu0 0.0
    %124 = vmatpush1.msra.mxu0 0.0
    %125 = vmatprep.subr.mxu0 0.0
    %126 = vmatpush1.msra.mxu0 0.0
    %127 = vmatprep.subr.mxu0 0.0
    %128 = vmatpush1.msra.mxu0 0.0
    %129 = vmatprep.subr.mxu0 0.0
    %130 = vmatpush1.msra.mxu0 0.0
    %131 = vmatprep.subr.mxu0 0.0
    %132 = vmatpush1.msra.mxu0 0.0
    %133 = vmatprep.subr.mxu0 0.0
    %134 = vmatpush1.msra.mxu0 0.0
    %135 = vmatprep.mubr.f32.mxu0 0.0
    %136 = vmatmul.mubr.f32.gmra.mrb[0].mxu0 %v69
    %v137 = vpop.f32.mrb[0].mxu0
    %v138 = vadd.f32 0.0, %v137
    %v139 = vpop.f32.mrb[0].mxu0
    %140 = vdwg.mxu0
    %v141 = vadd.f32 %v66, %v138
    %v142 = vadd.f32 %v141, %v61
    %v143 = vtanh.pop %v142
    %s144 = scalar_lea.vmem [#allocation3], 16
    %v145 = vld [vmem:[%s144] sm:$0xff]
    %v147 = vsel %vm67, %v143, 0
    %149 = vmatprep.subr.mxu0 0.0
    %150 = vmatpush1.msra.mxu0 %v50
    %151 = vmatprep.subr.mxu0 0.0
    %152 = vmatpush1.msra.mxu0 %v51
    %153 = vmatprep.subr.mxu0 0.0
    %154 = vmatpush1.msra.mxu0 %v52
    %155 = vmatprep.subr.mxu0 0.0
    %156 = vmatpush1.msra.mxu0 %v53
    %157 = vmatprep.subr.mxu0 0.0
    %158 = vmatpush1.msra.mxu0 0.0
    %159 = vmatprep.subr.mxu0 0.0
    %160 = vmatpush1.msra.mxu0 0.0
    %161 = vmatprep.subr.mxu0 0.0
    %162 = vmatpush1.msra.mxu0 0.0
    %163 = vmatprep.subr.mxu0 0.0
    %164 = vmatpush1.msra.mxu0 0.0
    %165 = vmatprep.subr.mxu0 0.0
    %166 = vmatpush1.msra.mxu0 0.0
    %167 = vmatprep.subr.mxu0 0.0
    %168 = vmatpush1.msra.mxu0 0.0
    %169 = vmatprep.subr.mxu0 0.0
    %170 = vmatpush1.msra.mxu0 0.0
    %171 = vmatprep.subr.mxu0 0.0
    %172 = vmatpush1.msra.mxu0 0.0
    %173 = vmatprep.subr.mxu0 0.0
    %174 = vmatpush1.msra.mxu0 0.0
    %175 = vmatprep.subr.mxu0 0.0
    %176 = vmatpush1.msra.mxu0 0.0
    %177 = vmatprep.subr.mxu0 0.0
    %178 = vmatpush1.msra.mxu0 0.0
    %179 = vmatprep.subr.mxu0 0.0
    %180 = vmatpush1.msra.mxu0 0.0
    %181 = vmatprep.subr.mxu0 0.0
    %182 = vmatpush1.msra.mxu0 0.0
    %183 = vmatprep.subr.mxu0 0.0
    %184 = vmatpush1.msra.mxu0 0.0
    %185 = vmatprep.subr.mxu0 0.0
    %186 = vmatpush1.msra.mxu0 0.0
    %187 = vmatprep.subr.mxu0 0.0
    %188 = vmatpush1.msra.mxu0 0.0
    %189 = vmatprep.subr.mxu0 0.0
    %190 = vmatpush1.msra.mxu0 0.0
    %191 = vmatprep.subr.mxu0 0.0
    %192 = vmatpush1.msra.mxu0 0.0
    %193 = vmatprep.subr.mxu0 0.0
    %194 = vmatpush1.msra.mxu0 0.0
    %195 = vmatprep.subr.mxu0 0.0
    %196 = vmatpush1.msra.mxu0 0.0
    %197 = vmatprep.subr.mxu0 0.0
    %198 = vmatpush1.msra.mxu0 0.0
    %199 = vmatprep.subr.mxu0 0.0
    %200 = vmatpush1.msra.mxu0 0.0
    %201 = vmatprep.subr.mxu0 0.0
    %202 = vmatpush1.msra.mxu0 0.0
    %203 = vmatprep.subr.mxu0 0.0
    %204 = vmatpush1.msra.mxu0 0.0
    %205 = vmatprep.subr.mxu0 0.0
    %206 = vmatpush1.msra.mxu0 0.0
    %207 = vmatprep.subr.mxu0 0.0
    %208 = vmatpush1.msra.mxu0 0.0
    %209 = vmatprep.subr.mxu0 0.0
    %210 = vmatpush1.msra.mxu0 0.0
    %211 = vmatprep.subr.mxu0 0.0
    %212 = vmatpush1.msra.mxu0 0.0
    %213 = vmatprep.mubr.f32.mxu0 0.0
    %214 = vmatmul.mubr.f32.gmra.mrb[0].mxu0 %v147
    %v215 = vpop.f32.mrb[0].mxu0
    %v216 = vadd.f32 0.0, %v215
    %v217 = vpop.f32.mrb[0].mxu0
    %218 = vdwg.mxu0
    %v219 = vadd.f32 %v145, %v216
    %v220 = vadd.f32 %v219, %v61
    %v221 = vtanh.pop %v220
    %s222 = scalar_lea.vmem [#allocation3], 24
    %v223 = vld [vmem:[%s222] sm:$0xff]
    %v225 = vsel %vm67, %v221, 0
    %227 = vmatprep.subr.mxu0 0.0
    %228 = vmatpush1.msra.mxu0 %v50
    %229 = vmatprep.subr.mxu0 0.0
    %230 = vmatpush1.msra.mxu0 %v51
    %231 = vmatprep.subr.mxu0 0.0
    %232 = vmatpush1.msra.mxu0 %v52
    %233 = vmatprep.subr.mxu0 0.0
    %234 = vmatpush1.msra.mxu0 %v53
    %235 = vmatprep.subr.mxu0 0.0
    %236 = vmatpush1.msra.mxu0 0.0
    %237 = vmatprep.subr.mxu0 0.0
    %238 = vmatpush1.msra.mxu0 0.0
    %239 = vmatprep.subr.mxu0 0.0
    %240 = vmatpush1.msra.mxu0 0.0
    %241 = vmatprep.subr.mxu0 0.0
    %242 = vmatpush1.msra.mxu0 0.0
    %243 = vmatprep.subr.mxu0 0.0
    %244 = vmatpush1.msra.mxu0 0.0
    %245 = vmatprep.subr.mxu0 0.0
    %246 = vmatpush1.msra.mxu0 0.0
    %247 = vmatprep.subr.mxu0 0.0
    %248 = vmatpush1.msra.mxu0 0.0
    %249 = vmatprep.subr.mxu0 0.0
    %250 = vmatpush1.msra.mxu0 0.0
    %251 = vmatprep.subr.mxu0 0.0
    %252 = vmatpush1.msra.mxu0 0.0
    %253 = vmatprep.subr.mxu0 0.0
    %254 = vmatpush1.msra.mxu0 0.0
    %255 = vmatprep.subr.mxu0 0.0
    %256 = vmatpush1.msra.mxu0 0.0
    %257 = vmatprep.subr.mxu0 0.0
    %258 = vmatpush1.msra.mxu0 0.0
    %259 = vmatprep.subr.mxu0 0.0
    %260 = vmatpush1.msra.mxu0 0.0
    %261 = vmatprep.subr.mxu0 0.0
    %262 = vmatpush1.msra.mxu0 0.0
    %263 = vmatprep.subr.mxu0 0.0
    %264 = vmatpush1.msra.mxu0 0.0
    %265 = vmatprep.subr.mxu0 0.0
    %266 = vmatpush1.msra.mxu0 0.0
    %267 = vmatprep.subr.mxu0 0.0
    %268 = vmatpush1.msra.mxu0 0.0
    %269 = vmatprep.subr.mxu0 0.0
    %270 = vmatpush1.msra.mxu0 0.0
    %271 = vmatprep.subr.mxu0 0.0
    %272 = vmatpush1.msra.mxu0 0.0
    %273 = vmatprep.subr.mxu0 0.0
    %274 = vmatpush1.msra.mxu0 0.0
    %275 = vmatprep.subr.mxu0 0.0
    %276 = vmatpush1.msra.mxu0 0.0
    %277 = vmatprep.subr.mxu0 0.0
    %278 = vmatpush1.msra.mxu0 0.0
    %279 = vmatprep.subr.mxu0 0.0
    %280 = vmatpush1.msra.mxu0 0.0
    %281 = vmatprep.subr.mxu0 0.0
    %282 = vmatpush1.msra.mxu0 0.0
    %283 = vmatprep.subr.mxu0 0.0
    %284 = vmatpush1.msra.mxu0 0.0
    %285 = vmatprep.subr.mxu0 0.0
    %286 = vmatpush1.msra.mxu0 0.0
    %287 = vmatprep.subr.mxu0 0.0
    %288 = vmatpush1.msra.mxu0 0.0
    %289 = vmatprep.subr.mxu0 0.0
    %290 = vmatpush1.msra.mxu0 0.0
    %291 = vmatprep.mubr.f32.mxu0 0.0
    %292 = vmatmul.mubr.f32.gmra.mrb[0].mxu0 %v225
    %v293 = vpop.f32.mrb[0].mxu0
    %v294 = vadd.f32 0.0, %v293
    %v295 = vpop.f32.mrb[0].mxu0
    %296 = vdwg.mxu0
    %v297 = vadd.f32 %v223, %v294
    %v298 = vadd.f32 %v297, %v61
    %v299 = vtanh.pop %v298
    %s300 = scalar_lea.vmem [#allocation3], 32
    %v301 = vld [vmem:[%s300] sm:$0xff]
    %v303 = vsel %vm67, %v299, 0
    %305 = vmatprep.subr.mxu0 0.0
    %306 = vmatpush1.msra.mxu0 %v50
    %307 = vmatprep.subr.mxu0 0.0
    %308 = vmatpush1.msra.mxu0 %v51
    %309 = vmatprep.subr.mxu0 0.0
    %310 = vmatpush1.msra.mxu0 %v52
    %311 = vmatprep.subr.mxu0 0.0
    %312 = vmatpush1.msra.mxu0 %v53
    %313 = vmatprep.subr.mxu0 0.0
    %314 = vmatpush1.msra.mxu0 0.0
    %315 = vmatprep.subr.mxu0 0.0
    %316 = vmatpush1.msra.mxu0 0.0
    %317 = vmatprep.subr.mxu0 0.0
    %318 = vmatpush1.msra.mxu0 0.0
    %319 = vmatprep.subr.mxu0 0.0
    %320 = vmatpush1.msra.mxu0 0.0
    %321 = vmatprep.subr.mxu0 0.0
    %322 = vmatpush1.msra.mxu0 0.0
    %323 = vmatprep.subr.mxu0 0.0
    %324 = vmatpush1.msra.mxu0 0.0
    %325 = vmatprep.subr.mxu0 0.0
    %326 = vmatpush1.msra.mxu0 0.0
    %327 = vmatprep.subr.mxu0 0.0
    %328 = vmatpush1.msra.mxu0 0.0
    %329 = vmatprep.subr.mxu0 0.0
    %330 = vmatpush1.msra.mxu0 0.0
    %331 = vmatprep.subr.mxu0 0.0
    %332 = vmatpush1.msra.mxu0 0.0
    %333 = vmatprep.subr.mxu0 0.0
    %334 = vmatpush1.msra.mxu0 0.0
    %335 = vmatprep.subr.mxu0 0.0
    %336 = vmatpush1.msra.mxu0 0.0
    %337 = vmatprep.subr.mxu0 0.0
    %338 = vmatpush1.msra.mxu0 0.0
    %339 = vmatprep.subr.mxu0 0.0
    %340 = vmatpush1.msra.mxu0 0.0
    %341 = vmatprep.subr.mxu0 0.0
    %342 = vmatpush1.msra.mxu0 0.0
    %343 = vmatprep.subr.mxu0 0.0
    %344 = vmatpush1.msra.mxu0 0.0
    %345 = vmatprep.subr.mxu0 0.0
    %346 = vmatpush1.msra.mxu0 0.0
    %347 = vmatprep.subr.mxu0 0.0
    %348 = vmatpush1.msra.mxu0 0.0
    %349 = vmatprep.subr.mxu0 0.0
    %350 = vmatpush1.msra.mxu0 0.0
    %351 = vmatprep.subr.mxu0 0.0
    %352 = vmatpush1.msra.mxu0 0.0
    %353 = vmatprep.subr.mxu0 0.0
    %354 = vmatpush1.msra.mxu0 0.0
    %355 = vmatprep.subr.mxu0 0.0
    %356 = vmatpush1.msra.mxu0 0.0
    %357 = vmatprep.subr.mxu0 0.0
    %358 = vmatpush1.msra.mxu0 0.0
    %359 = vmatprep.subr.mxu0 0.0
    %360 = vmatpush1.msra.mxu0 0.0
    %361 = vmatprep.subr.mxu0 0.0
    %362 = vmatpush1.msra.mxu0 0.0
    %363 = vmatprep.subr.mxu0 0.0
    %364 = vmatpush1.msra.mxu0 0.0
    %365 = vmatprep.subr.mxu0 0.0
    %366 = vmatpush1.msra.mxu0 0.0
    %367 = vmatprep.subr.mxu0 0.0
    %368 = vmatpush1.msra.mxu0 0.0
    %369 = vmatprep.mubr.f32.mxu0 0.0
    %370 = vmatmul.mubr.f32.gmra.mrb[0].mxu0 %v303
    %v371 = vpop.f32.mrb[0].mxu0
    %v372 = vadd.f32 0.0, %v371
    %v373 = vpop.f32.mrb[0].mxu0
    %374 = vdwg.mxu0
    %v375 = vadd.f32 %v301, %v372
    %v376 = vadd.f32 %v375, %v61
    %v377 = vtanh.pop %v376
    %s378 = scalar_lea.vmem [#allocation3], 40
    %v379 = vld [vmem:[%s378] sm:$0xff]
    %v381 = vsel %vm67, %v377, 0
    %383 = vmatprep.subr.mxu0 0.0
    %384 = vmatpush1.msra.mxu0 %v50
    %385 = vmatprep.subr.mxu0 0.0
    %386 = vmatpush1.msra.mxu0 %v51
    %387 = vmatprep.subr.mxu0 0.0
    %388 = vmatpush1.msra.mxu0 %v52
    %389 = vmatprep.subr.mxu0 0.0
    %390 = vmatpush1.msra.mxu0 %v53
    %391 = vmatprep.subr.mxu0 0.0
    %392 = vmatpush1.msra.mxu0 0.0
    %393 = vmatprep.subr.mxu0 0.0
    %394 = vmatpush1.msra.mxu0 0.0
    %395 = vmatprep.subr.mxu0 0.0
    %396 = vmatpush1.msra.mxu0 0.0
    %397 = vmatprep.subr.mxu0 0.0
    %398 = vmatpush1.msra.mxu0 0.0
    %399 = vmatprep.subr.mxu0 0.0
    %400 = vmatpush1.msra.mxu0 0.0
    %401 = vmatprep.subr.mxu0 0.0
    %402 = vmatpush1.msra.mxu0 0.0
    %403 = vmatprep.subr.mxu0 0.0
    %404 = vmatpush1.msra.mxu0 0.0
    %405 = vmatprep.subr.mxu0 0.0
    %406 = vmatpush1.msra.mxu0 0.0
    %407 = vmatprep.subr.mxu0 0.0
    %408 = vmatpush1.msra.mxu0 0.0
    %409 = vmatprep.subr.mxu0 0.0
    %410 = vmatpush1.msra.mxu0 0.0
    %411 = vmatprep.subr.mxu0 0.0
    %412 = vmatpush1.msra.mxu0 0.0
    %413 = vmatprep.subr.mxu0 0.0
    %414 = vmatpush1.msra.mxu0 0.0
    %415 = vmatprep.subr.mxu0 0.0
    %416 = vmatpush1.msra.mxu0 0.0
    %417 = vmatprep.subr.mxu0 0.0
    %418 = vmatpush1.msra.mxu0 0.0
    %419 = vmatprep.subr.mxu0 0.0
    %420 = vmatpush1.msra.mxu0 0.0
    %421 = vmatprep.subr.mxu0 0.0
    %422 = vmatpush1.msra.mxu0 0.0
    %423 = vmatprep.subr.mxu0 0.0
    %424 = vmatpush1.msra.mxu0 0.0
    %425 = vmatprep.subr.mxu0 0.0
    %426 = vmatpush1.msra.mxu0 0.0
    %427 = vmatprep.subr.mxu0 0.0
    %428 = vmatpush1.msra.mxu0 0.0
    %429 = vmatprep.subr.mxu0 0.0
    %430 = vmatpush1.msra.mxu0 0.0
    %431 = vmatprep.subr.mxu0 0.0
    %432 = vmatpush1.msra.mxu0 0.0
    %433 = vmatprep.subr.mxu0 0.0
    %434 = vmatpush1.msra.mxu0 0.0
    %435 = vmatprep.subr.mxu0 0.0
    %436 = vmatpush1.msra.mxu0 0.0
    %437 = vmatprep.subr.mxu0 0.0
    %438 = vmatpush1.msra.mxu0 0.0
    %439 = vmatprep.subr.mxu0 0.0
    %440 = vmatpush1.msra.mxu0 0.0
    %441 = vmatprep.subr.mxu0 0.0
    %442 = vmatpush1.msra.mxu0 0.0
    %443 = vmatprep.subr.mxu0 0.0
    %444 = vmatpush1.msra.mxu0 0.0
    %445 = vmatprep.subr.mxu0 0.0
    %446 = vmatpush1.msra.mxu0 0.0
    %447 = vmatprep.mubr.f32.mxu0 0.0
    %448 = vmatmul.mubr.f32.gmra.mrb[0].mxu0 %v381
    %v449 = vpop.f32.mrb[0].mxu0
    %v450 = vadd.f32 0.0, %v449
    %v451 = vpop.f32.mrb[0].mxu0
    %452 = vdwg.mxu0
    %v453 = vadd.f32 %v379, %v450
    %v454 = vadd.f32 %v453, %v61
    %v455 = vtanh.pop %v454
    %s456 = scalar_lea.vmem [#allocation3], 48
    %v457 = vld [vmem:[%s456] sm:$0xff]
    %v459 = vsel %vm67, %v455, 0
    %461 = vmatprep.subr.mxu0 0.0
    %462 = vmatpush1.msra.mxu0 %v50
    %463 = vmatprep.subr.mxu0 0.0
    %464 = vmatpush1.msra.mxu0 %v51
    %465 = vmatprep.subr.mxu0 0.0
    %466 = vmatpush1.msra.mxu0 %v52
    %467 = vmatprep.subr.mxu0 0.0
    %468 = vmatpush1.msra.mxu0 %v53
    %469 = vmatprep.subr.mxu0 0.0
    %470 = vmatpush1.msra.mxu0 0.0
    %471 = vmatprep.subr.mxu0 0.0
    %472 = vmatpush1.msra.mxu0 0.0
    %473 = vmatprep.subr.mxu0 0.0
    %474 = vmatpush1.msra.mxu0 0.0
    %475 = vmatprep.subr.mxu0 0.0
    %476 = vmatpush1.msra.mxu0 0.0
    %477 = vmatprep.subr.mxu0 0.0
    %478 = vmatpush1.msra.mxu0 0.0
    %479 = vmatprep.subr.mxu0 0.0
    %480 = vmatpush1.msra.mxu0 0.0
    %481 = vmatprep.subr.mxu0 0.0
    %482 = vmatpush1.msra.mxu0 0.0
    %483 = vmatprep.subr.mxu0 0.0
    %484 = vmatpush1.msra.mxu0 0.0
    %485 = vmatprep.subr.mxu0 0.0
    %486 = vmatpush1.msra.mxu0 0.0
    %487 = vmatprep.subr.mxu0 0.0
    %488 = vmatpush1.msra.mxu0 0.0
    %489 = vmatprep.subr.mxu0 0.0
    %490 = vmatpush1.msra.mxu0 0.0
    %491 = vmatprep.subr.mxu0 0.0
    %492 = vmatpush1.msra.mxu0 0.0
    %493 = vmatprep.subr.mxu0 0.0
    %494 = vmatpush1.msra.mxu0 0.0
    %495 = vmatprep.subr.mxu0 0.0
    %496 = vmatpush1.msra.mxu0 0.0
    %497 = vmatprep.subr.mxu0 0.0
    %498 = vmatpush1.msra.mxu0 0.0
    %499 = vmatprep.subr.mxu0 0.0
    %500 = vmatpush1.msra.mxu0 0.0
    %501 = vmatprep.subr.mxu0 0.0
    %502 = vmatpush1.msra.mxu0 0.0
    %503 = vmatprep.subr.mxu0 0.0
    %504 = vmatpush1.msra.mxu0 0.0
    %505 = vmatprep.subr.mxu0 0.0
    %506 = vmatpush1.msra.mxu0 0.0
    %507 = vmatprep.subr.mxu0 0.0
    %508 = vmatpush1.msra.mxu0 0.0
    %509 = vmatprep.subr.mxu0 0.0
    %510 = vmatpush1.msra.mxu0 0.0
    %511 = vmatprep.subr.mxu0 0.0
    %512 = vmatpush1.msra.mxu0 0.0
    %513 = vmatprep.subr.mxu0 0.0
    %514 = vmatpush1.msra.mxu0 0.0
    %515 = vmatprep.subr.mxu0 0.0
    %516 = vmatpush1.msra.mxu0 0.0
    %517 = vmatprep.subr.mxu0 0.0
    %518 = vmatpush1.msra.mxu0 0.0
    %519 = vmatprep.subr.mxu0 0.0
    %520 = vmatpush1.msra.mxu0 0.0
    %521 = vmatprep.subr.mxu0 0.0
    %522 = vmatpush1.msra.mxu0 0.0
    %523 = vmatprep.subr.mxu0 0.0
    %524 = vmatpush1.msra.mxu0 0.0
    %525 = vmatprep.mubr.f32.mxu0 0.0
    %526 = vmatmul.mubr.f32.gmra.mrb[0].mxu0 %v459
    %v527 = vpop.f32.mrb[0].mxu0
    %v528 = vadd.f32 0.0, %v527
    %v529 = vpop.f32.mrb[0].mxu0
    %530 = vdwg.mxu0
    %v531 = vadd.f32 %v457, %v528
    %v532 = vadd.f32 %v531, %v61
    %v533 = vtanh.pop %v532
    %s534 = scalar_lea.vmem [#allocation3], 56
    %v535 = vld [vmem:[%s534] sm:$0xff]
    %v537 = vsel %vm67, %v533, 0
    %539 = vmatprep.subr.mxu0 0.0
    %540 = vmatpush1.msra.mxu0 %v50
    %541 = vmatprep.subr.mxu0 0.0
    %542 = vmatpush1.msra.mxu0 %v51
    %543 = vmatprep.subr.mxu0 0.0
    %544 = vmatpush1.msra.mxu0 %v52
    %545 = vmatprep.subr.mxu0 0.0
    %546 = vmatpush1.msra.mxu0 %v53
    %547 = vmatprep.subr.mxu0 0.0
    %548 = vmatpush1.msra.mxu0 0.0
    %549 = vmatprep.subr.mxu0 0.0
    %550 = vmatpush1.msra.mxu0 0.0
    %551 = vmatprep.subr.mxu0 0.0
    %552 = vmatpush1.msra.mxu0 0.0
    %553 = vmatprep.subr.mxu0 0.0
    %554 = vmatpush1.msra.mxu0 0.0
    %555 = vmatprep.subr.mxu0 0.0
    %556 = vmatpush1.msra.mxu0 0.0
    %557 = vmatprep.subr.mxu0 0.0
    %558 = vmatpush1.msra.mxu0 0.0
    %559 = vmatprep.subr.mxu0 0.0
    %560 = vmatpush1.msra.mxu0 0.0
    %561 = vmatprep.subr.mxu0 0.0
    %562 = vmatpush1.msra.mxu0 0.0
    %563 = vmatprep.subr.mxu0 0.0
    %564 = vmatpush1.msra.mxu0 0.0
    %565 = vmatprep.subr.mxu0 0.0
    %566 = vmatpush1.msra.mxu0 0.0
    %567 = vmatprep.subr.mxu0 0.0
    %568 = vmatpush1.msra.mxu0 0.0
    %569 = vmatprep.subr.mxu0 0.0
    %570 = vmatpush1.msra.mxu0 0.0
    %571 = vmatprep.subr.mxu0 0.0
    %572 = vmatpush1.msra.mxu0 0.0
    %573 = vmatprep.subr.mxu0 0.0
    %574 = vmatpush1.msra.mxu0 0.0
    %575 = vmatprep.subr.mxu0 0.0
    %576 = vmatpush1.msra.mxu0 0.0
    %577 = vmatprep.subr.mxu0 0.0
    %578 = vmatpush1.msra.mxu0 0.0
    %579 = vmatprep.subr.mxu0 0.0
    %580 = vmatpush1.msra.mxu0 0.0
    %581 = vmatprep.subr.mxu0 0.0
    %582 = vmatpush1.msra.mxu0 0.0
    %583 = vmatprep.subr.mxu0 0.0
    %584 = vmatpush1.msra.mxu0 0.0
    %585 = vmatprep.subr.mxu0 0.0
    %586 = vmatpush1.msra.mxu0 0.0
    %587 = vmatprep.subr.mxu0 0.0
    %588 = vmatpush1.msra.mxu0 0.0
    %589 = vmatprep.subr.mxu0 0.0
    %590 = vmatpush1.msra.mxu0 0.0
    %591 = vmatprep.subr.mxu0 0.0
    %592 = vmatpush1.msra.mxu0 0.0
    %593 = vmatprep.subr.mxu0 0.0
    %594 = vmatpush1.msra.mxu0 0.0
    %595 = vmatprep.subr.mxu0 0.0
    %596 = vmatpush1.msra.mxu0 0.0
    %597 = vmatprep.subr.mxu0 0.0
    %598 = vmatpush1.msra.mxu0 0.0
    %599 = vmatprep.subr.mxu0 0.0
    %600 = vmatpush1.msra.mxu0 0.0
    %601 = vmatprep.subr.mxu0 0.0
    %602 = vmatpush1.msra.mxu0 0.0
    %603 = vmatprep.mubr.f32.mxu0 0.0
    %604 = vmatmul.mubr.f32.gmra.mrb[0].mxu0 %v537
    %v605 = vpop.f32.mrb[0].mxu0
    %v606 = vadd.f32 0.0, %v605
    %v607 = vpop.f32.mrb[0].mxu0
    %608 = vdwg.mxu0
    %v609 = vadd.f32 %v535, %v606
    %v610 = vadd.f32 %v609, %v61
    %v611 = vtanh.pop %v610
    %v613 = vlaneseq
    %v614 = vshrl.u32 %v613, 7
    %v615 = vsub.s32 0, %v614
    %v616 = vrot.slane %v55, %v615
    %v618 = vmul.f32 %v611, %v616
    %v619 = vsel %vm67, %v618, 0.0
    %620 = vadd.xlane.f32.xlu0 %v619
    %v621 = vpop.xlane.xlu0 %620
    %v622 = vld [vmem:[#allocation2] sm:$0x1]
    %v624 = vlaneseq
    %v625 = vshrl.u32 %v624, 7
    %v626 = vsub.s32 0, %v625
    %v627 = vrot.slane %v622, %v626
    %v629 = vadd.f32 %v621, %v627
    %vm630 = vcmask 7168
    %631 = vst.msk [vmem:[%s5] sm:$0xff] %vm630, %v629
    // Predicated region
    $region30: #{tpu_custom_call.1} parent=1 // pred_check
      _
    $region31: #{tpu_custom_call.1} parent=1 // pred_check_branch
      %633 = sbr.rel (0) target = $region33
    $region32: #{tpu_custom_call.1} parent=1 // pred_region
      _
    $region33: #{tpu_custom_call.1} parent=1 // pred_fallthru
      _
    // Predicated region
    $region34: #{tpu_custom_call.1} parent=1 // pred_check
      _
    $region35: #{tpu_custom_call.1} parent=1 // pred_check_branch
      %635 = sbr.rel (0) target = $region37
    $region36: #{tpu_custom_call.1} parent=1 // pred_region
      _
    $region37: #{tpu_custom_call.1} parent=1 // pred_fallthru
      _
    %636 = vsyncpa [#allocation4], 1
    %637 = vsyncpa [#allocation6], 1

</llo_original>
